<compile_context>
chip_gen: v5e
topology: v5e:2x2
jax: 0.10.0
libtpu: 0.0.40
codegen_flags: <defaults>
</compile_context>

<pallas_src>
import functools

import jax
import jax.numpy as jnp
from jax.experimental import pallas as pl
from jax.experimental.pallas import tpu as pltpu


def _patch_embed_kernel(x_ref, w_ref, b_ref, g_ref, beta_ref, seg_ref, o_ref,
                        *, eps, inv_e):
    # x_ref: [TMp, Kp] packed patch rows; w_ref: [Kp, Ep] block-diagonal;
    # b/g/beta: [1, Ep]; seg_ref: [Ep, Ep] block-diagonal all-ones; o: [TMp, Ep].
    # Projection on the MXU: native-dtype operands, f32 accumulation.
    y = jnp.dot(x_ref[...], w_ref[...], preferred_element_type=jnp.float32)
    y = y + b_ref[...].astype(jnp.float32)

    # Per-segment (per original embedding vector) LayerNorm statistics.
    # seg is block-diagonal all-ones, so y @ seg is the segment sum broadcast
    # back across each segment -- no reshapes/transposes needed.
    seg = seg_ref[...]
    mean = jnp.dot(y, seg, preferred_element_type=jnp.float32) * inv_e
    d = y - mean
    var = jnp.dot(d * d, seg, preferred_element_type=jnp.float32) * inv_e
    yn = d * jax.lax.rsqrt(var + eps)
    out = yn * g_ref[...].astype(jnp.float32) + beta_ref[...].astype(jnp.float32)
    o_ref[...] = out.astype(o_ref.dtype)


def _padded_tile_bytes(rows, cols, itemsize):
    # VMEM tiles are padded to (8, 128) granularity on the last two dims.
    rows_p = -(-rows // 8) * 8
    cols_p = -(-cols // 128) * 128
    return rows_p * cols_p * itemsize


def patch_embed_pallas(x, weight, bias, gamma, beta, patch_size, eps=1e-5,
                       block_m=8192):
    """x: [N, C, H, W] (NCHW, like PyTorch). weight: [E, C, P, P].

    Returns ([N, L, E], (Hout, Wout)) matching PatchEmbed.forward.
    """
    n, c, h, w = x.shape
    e = weight.shape[0]
    p = patch_size
    assert h % p == 0 and w % p == 0
    hout, wout = h // p, w // p
    l = hout * wout
    m = n * l
    k = c * p * p

    # --- glue: patchify (reshape/transpose, no compute) ---
    # [N, C, Hout, P, Wout, P] -> [N, Hout, Wout, C, P, P] -> [M, K]
    patches = x.reshape(n, c, hout, p, wout, p)
    patches = jnp.transpose(patches, (0, 2, 4, 1, 3, 5)).reshape(m, k)
    # Conv weight [E, C, P, P] -> [K, E] (tiny).
    w_mat = jnp.transpose(weight.reshape(e, k))

    # --- lane packing: R consecutive rows per matrix row (lane-dense I/O) ---
    if e <= 128 and 128 % e == 0:
        r = 128 // e
        while r > 1 and m % r != 0:
            r //= 2
    else:
        r = 1
    mp, kp, ep = m // r, k * r, e * r

    x_packed = patches.reshape(mp, kp)                       # free (contiguous)
    if r > 1:
        w_packed = jnp.kron(jnp.eye(r, dtype=w_mat.dtype), w_mat)   # [Kp, Ep]
    else:
        w_packed = w_mat
    b_packed = jnp.tile(bias.reshape(1, e), (1, r))
    g_packed = jnp.tile(gamma.reshape(1, e), (1, r))
    beta_packed = jnp.tile(beta.reshape(1, e), (1, r))
    # Block-diagonal all-ones mask for segmented LayerNorm reductions.
    seg = jnp.kron(jnp.eye(r, dtype=jnp.float32), jnp.ones((e, e), jnp.float32))

    # --- row tile (in packed rows): multiple of 8, or the full extent ---
    tm_packed_target = max(8, (block_m // r // 8) * 8)
    tm_packed = mp if mp <= tm_packed_target else tm_packed_target

    # --- VMEM budget: (8,128)-padded, double-buffered, generation-aware cap ---
    itemsize = jnp.dtype(x.dtype).itemsize
    try:
        vmem_cap = pltpu.get_tpu_info().vmem_capacity_bytes
    except Exception:
        vmem_cap = 64 * 2**20                                # conservative (v7x)
    budget = (3 * vmem_cap) // 4

    def _vmem_need(rows):
        return (2 * _padded_tile_bytes(rows, kp, itemsize)       # X tiles
                + 2 * _padded_tile_bytes(rows, ep, itemsize)     # out tiles
                + 2 * _padded_tile_bytes(kp, ep, itemsize)       # weight
                + 2 * _padded_tile_bytes(ep, ep, 4)              # seg mask
                + 6 * _padded_tile_bytes(1, ep, itemsize))       # bias/affine

    need = _vmem_need(tm_packed)
    while tm_packed > 8 and need > budget:
        tm_packed = max(8, (tm_packed // 2 // 8) * 8)
        need = _vmem_need(tm_packed)
    vmem_limit = int(min(max(32 * 2**20, 2 * need), budget))

    grid = (pl.cdiv(mp, tm_packed),)
    kernel = functools.partial(_patch_embed_kernel, eps=eps, inv_e=1.0 / e)
    out_packed = pl.pallas_call(
        kernel,
        out_shape=jax.ShapeDtypeStruct((mp, ep), x.dtype),
        grid_spec=pltpu.PrefetchScalarGridSpec(
            num_scalar_prefetch=0,
            grid=grid,
            in_specs=[
                pl.BlockSpec((tm_packed, kp), lambda i: (i, 0)),  # packed X rows
                pl.BlockSpec((kp, ep), lambda i: (0, 0)),         # weight: resident
                pl.BlockSpec((1, ep), lambda i: (0, 0)),          # bias: resident
                pl.BlockSpec((1, ep), lambda i: (0, 0)),          # gamma: resident
                pl.BlockSpec((1, ep), lambda i: (0, 0)),          # beta: resident
                pl.BlockSpec((ep, ep), lambda i: (0, 0)),         # seg mask: resident
            ],
            out_specs=pl.BlockSpec((tm_packed, ep), lambda i: (i, 0)),
        ),
        compiler_params=pltpu.CompilerParams(
            dimension_semantics=("parallel",),
            vmem_limit_bytes=vmem_limit,
        ),
    )(x_packed, w_packed, b_packed, g_packed, beta_packed, seg)

    return out_packed.reshape(n, l, e), (hout, wout)


def _reference(x, weight, bias, gamma, beta, patch_size, eps=1e-5):
    # Pure-JAX reference of the PyTorch forward.
    y = jax.lax.conv_general_dilated(
        x, weight, window_strides=(patch_size, patch_size), padding="VALID",
        dimension_numbers=("NCHW", "OIHW", "NCHW"))
    y = y + bias.reshape(1, -1, 1, 1)
    n, e, ho, wo = y.shape
    y = y.reshape(n, e, ho * wo).transpose(0, 2, 1)  # [N, L, E]
    mean = jnp.mean(y, axis=-1, keepdims=True)
    var = jnp.mean((y - mean) ** 2, axis=-1, keepdims=True)
    return (y - mean) / jnp.sqrt(var + eps) * gamma + beta, (ho, wo)


def _make_inputs(key, n, c, h, w, e, p):
    kx, kw, kb = jax.random.split(key, 3)
    x = jax.random.normal(kx, (n, c, h, w), dtype=jnp.float32)
    weight = jax.random.normal(kw, (e, c, p, p), dtype=jnp.float32) * 0.05
    bias = jax.random.normal(kb, (e,), dtype=jnp.float32) * 0.05
    gamma = jnp.ones((e,), dtype=jnp.float32)
    beta = jnp.zeros((e,), dtype=jnp.float32)
    return x, weight, bias, gamma, beta


if __name__ == "__main__":
    # Module config: in_channels=4, embed_dims=32, patch_size=4
    in_channels, embed_dims, patch_size = 4, 32, 4
    key = jax.random.PRNGKey(0)

    # 1) Default config, small input (single block, packed R=4 path).
    N, H, W = 2, 16, 16
    x, weight, bias, gamma, beta = _make_inputs(key, N, in_channels, H, W,
                                                embed_dims, patch_size)
    ref, ref_hw = _reference(x, weight, bias, gamma, beta, patch_size)
    out, hw_shape = patch_embed_pallas(x, weight, bias, gamma, beta, patch_size)
    out = jax.block_until_ready(out)
    L = (H // patch_size) * (W // patch_size)
    assert out.shape == (N, L, embed_dims)
    assert hw_shape == ref_hw
    assert jnp.allclose(out, ref, atol=1e-4, rtol=1e-4)

    # 2) Multi-block pipelined path (exact division): M=128 rows, mp=32, TMp=8.
    N2, H2, W2 = 2, 32, 32
    x2, w2, b2, g2, be2 = _make_inputs(key, N2, in_channels, H2, W2,
                                       embed_dims, patch_size)
    ref2, _ = _reference(x2, w2, b2, g2, be2, patch_size)
    out2, _ = patch_embed_pallas(x2, w2, b2, g2, be2, patch_size, block_m=32)
    out2 = jax.block_until_ready(out2)
    assert jnp.allclose(out2, ref2, atol=1e-4, rtol=1e-4)

    # 3) Partial last block: M=160 rows, mp=40, TMp=16 -> grid=3 with masked edge.
    N3, H3, W3 = 2, 32, 40
    x3, w3, b3, g3, be3 = _make_inputs(key, N3, in_channels, H3, W3,
                                       embed_dims, patch_size)
    ref3, _ = _reference(x3, w3, b3, g3, be3, patch_size)
    out3, _ = patch_embed_pallas(x3, w3, b3, g3, be3, patch_size, block_m=64)
    out3 = jax.block_until_ready(out3)
    assert jnp.allclose(out3, ref3, atol=1e-4, rtol=1e-4)

    # 4) Packing fallback (M=9 rows is odd -> R=1 unpacked path).
    N4, H4, W4 = 1, 12, 12
    x4, w4, b4, g4, be4 = _make_inputs(key, N4, in_channels, H4, W4,
                                       embed_dims, patch_size)
    ref4, _ = _reference(x4, w4, b4, g4, be4, patch_size)
    out4, _ = patch_embed_pallas(x4, w4, b4, g4, be4, patch_size)
    out4 = jax.block_until_ready(out4)
    assert jnp.allclose(out4, ref4, atol=1e-4, rtol=1e-4)

    print("KERNEL_OK")
</pallas_src>

<mosaic_0001>
module attributes {stable_mosaic.version = 11 : i64} {
  func.func @_patch_embed_kernel(%arg0: i32, %arg1: memref<8x256xf32, #tpu.memory_space<vmem>>, %arg2: memref<256x128xf32, #tpu.memory_space<vmem>>, %arg3: memref<1x128xf32, #tpu.memory_space<vmem>>, %arg4: memref<1x128xf32, #tpu.memory_space<vmem>>, %arg5: memref<1x128xf32, #tpu.memory_space<vmem>>, %arg6: memref<128x128xf32, #tpu.memory_space<vmem>>, %arg7: memref<8x128xf32, #tpu.memory_space<vmem>>) attributes {dimension_semantics = [#tpu.dimension_semantics<parallel>], iteration_bounds = array<i64: 1>, scalar_prefetch = 0 : i64, scratch_operands = 0 : i64, tpu.core_type = #tpu.core_type<tc>, window_params = [{transform_indices = @transform_0, window_bounds = array<i64: 8, 256>}, {pipeline_mode = #tpu.pipeline_mode<synchronous>, transform_indices = @transform_1, window_bounds = array<i64: 256, 128>}, {pipeline_mode = #tpu.pipeline_mode<synchronous>, transform_indices = @transform_2, window_bounds = array<i64: 1, 128>}, {pipeline_mode = #tpu.pipeline_mode<synchronous>, transform_indices = @transform_3, window_bounds = array<i64: 1, 128>}, {pipeline_mode = #tpu.pipeline_mode<synchronous>, transform_indices = @transform_4, window_bounds = array<i64: 1, 128>}, {pipeline_mode = #tpu.pipeline_mode<synchronous>, transform_indices = @transform_5, window_bounds = array<i64: 128, 128>}, {transform_indices = @transform_6, window_bounds = array<i64: 8, 128>}]} {
    %c0 = arith.constant 0 : index
    %c0_0 = arith.constant 0 : index
    %0 = vector.load %arg1[%c0, %c0_0] : memref<8x256xf32, #tpu.memory_space<vmem>>, vector<8x256xf32>
    %c0_1 = arith.constant 0 : index
    %c0_2 = arith.constant 0 : index
    %1 = vector.load %arg2[%c0_1, %c0_2] : memref<256x128xf32, #tpu.memory_space<vmem>>, vector<256x128xf32>
    %cst = arith.constant dense<0.000000e+00> : vector<8x128xf32>
    %2 = tpu.matmul %0, %1, %cst {dimension_numbers = #tpu.dot_dimension_numbers<[1], [0], [0], [1], [0, 0, 1, 1], [], []>} : vector<8x256xf32>, vector<256x128xf32>, vector<8x128xf32> -> vector<8x128xf32>
    %c0_3 = arith.constant 0 : index
    %c0_4 = arith.constant 0 : index
    %3 = vector.load %arg3[%c0_3, %c0_4] : memref<1x128xf32, #tpu.memory_space<vmem>>, vector<1x128xf32>
    %4 = vector.broadcast %3 : vector<1x128xf32> to vector<8x128xf32>
    %5 = arith.addf %2, %4 : vector<8x128xf32>
    %c0_5 = arith.constant 0 : index
    %c0_6 = arith.constant 0 : index
    %6 = vector.load %arg6[%c0_5, %c0_6] : memref<128x128xf32, #tpu.memory_space<vmem>>, vector<128x128xf32>
    %cst_7 = arith.constant dense<0.000000e+00> : vector<8x128xf32>
    %7 = tpu.matmul %5, %6, %cst_7 {dimension_numbers = #tpu.dot_dimension_numbers<[1], [0], [0], [1], [0, 0, 1, 1], [], []>} : vector<8x128xf32>, vector<128x128xf32>, vector<8x128xf32> -> vector<8x128xf32>
    %cst_8 = arith.constant 3.125000e-02 : f32
    %8 = vector.broadcast %cst_8 : f32 to vector<8x128xf32>
    %9 = arith.mulf %7, %8 : vector<8x128xf32>
    %10 = arith.subf %5, %9 : vector<8x128xf32>
    %11 = arith.mulf %10, %10 : vector<8x128xf32>
    %cst_9 = arith.constant dense<0.000000e+00> : vector<8x128xf32>
    %12 = tpu.matmul %11, %6, %cst_9 {dimension_numbers = #tpu.dot_dimension_numbers<[1], [0], [0], [1], [0, 0, 1, 1], [], []>} : vector<8x128xf32>, vector<128x128xf32>, vector<8x128xf32> -> vector<8x128xf32>
    %cst_10 = arith.constant 3.125000e-02 : f32
    %13 = vector.broadcast %cst_10 : f32 to vector<8x128xf32>
    %14 = arith.mulf %12, %13 : vector<8x128xf32>
    %cst_11 = arith.constant 9.99999974E-6 : f32
    %15 = vector.broadcast %cst_11 : f32 to vector<8x128xf32>
    %16 = arith.addf %14, %15 : vector<8x128xf32>
    %17 = math.rsqrt %16 : vector<8x128xf32>
    %18 = arith.mulf %10, %17 : vector<8x128xf32>
    %c0_12 = arith.constant 0 : index
    %c0_13 = arith.constant 0 : index
    %19 = vector.load %arg4[%c0_12, %c0_13] : memref<1x128xf32, #tpu.memory_space<vmem>>, vector<1x128xf32>
    %20 = vector.broadcast %19 : vector<1x128xf32> to vector<8x128xf32>
    %21 = arith.mulf %18, %20 : vector<8x128xf32>
    %c0_14 = arith.constant 0 : index
    %c0_15 = arith.constant 0 : index
    %22 = vector.load %arg5[%c0_14, %c0_15] : memref<1x128xf32, #tpu.memory_space<vmem>>, vector<1x128xf32>
    %23 = vector.broadcast %22 : vector<1x128xf32> to vector<8x128xf32>
    %24 = arith.addf %21, %23 : vector<8x128xf32>
    %c0_16 = arith.constant 0 : index
    %c0_17 = arith.constant 0 : index
    %25 = vector.load %arg7[%c0_16, %c0_17] : memref<8x128xf32, #tpu.memory_space<vmem>>, vector<8x128xf32>
    tpu.vector_store %arg7[%c0_16, %c0_17], %24 {strides = array<i32>} : memref<8x128xf32, #tpu.memory_space<vmem>>, vector<8x128xf32>,
    return
  }
  func.func @transform_0(%arg0: i32) -> (i32, i32) {
    %c0_i32 = arith.constant 0 : i32
    %c0_i32_0 = arith.constant 0 : i32
    return %arg0, %c0_i32 : i32, i32
  }
  func.func @transform_1(%arg0: i32) -> (i32, i32) {
    %c0_i32 = arith.constant 0 : i32
    %c0_i32_0 = arith.constant 0 : i32
    %c0_i32_1 = arith.constant 0 : i32
    return %c0_i32, %c0_i32_0 : i32, i32
  }
  func.func @transform_2(%arg0: i32) -> (i32, i32) {
    %c0_i32 = arith.constant 0 : i32
    %c0_i32_0 = arith.constant 0 : i32
    %c0_i32_1 = arith.constant 0 : i32
    return %c0_i32, %c0_i32_0 : i32, i32
  }
  func.func @transform_3(%arg0: i32) -> (i32, i32) {
    %c0_i32 = arith.constant 0 : i32
    %c0_i32_0 = arith.constant 0 : i32
    %c0_i32_1 = arith.constant 0 : i32
    return %c0_i32, %c0_i32_0 : i32, i32
  }
  func.func @transform_4(%arg0: i32) -> (i32, i32) {
    %c0_i32 = arith.constant 0 : i32
    %c0_i32_0 = arith.constant 0 : i32
    %c0_i32_1 = arith.constant 0 : i32
    return %c0_i32, %c0_i32_0 : i32, i32
  }
  func.func @transform_5(%arg0: i32) -> (i32, i32) {
    %c0_i32 = arith.constant 0 : i32
    %c0_i32_0 = arith.constant 0 : i32
    %c0_i32_1 = arith.constant 0 : i32
    return %c0_i32, %c0_i32_0 : i32, i32
  }
  func.func @transform_6(%arg0: i32) -> (i32, i32) {
    %c0_i32 = arith.constant 0 : i32
    %c0_i32_0 = arith.constant 0 : i32
    return %arg0, %c0_i32 : i32, i32
  }
}

</mosaic_0001>

<llo_original>
// kernel: tpu_custom_call.1
$region0: #{tpu_custom_call.1}
  #allocation0 [shape = 'u32[]', space=smem, size = 0x4, offset = 0x4, fixed_abs, tag = 'smem constant byte address 0x4 - core index']
  #allocation1 [shape = 'u32[72,128]{1,0:T(1,128)}', space=vmem, size = 0x9000, scoped, tag = 'internal scratch']
  %s0 = inlined_call_operand.hbm [shape: f32[8,256], index: 0, kind: input, shape index: {}]
  %s1 = inlined_call_operand.hbm [shape: f32[256,128], index: 1, kind: input, shape index: {}]
  %s2 = inlined_call_operand.vmem [shape: f32[1,128], index: 2, kind: input, shape index: {}]
  %s3 = inlined_call_operand.vmem [shape: f32[1,128], index: 3, kind: input, shape index: {}]
  %s4 = inlined_call_operand.vmem [shape: f32[1,128], index: 4, kind: input, shape index: {}]
  %s5 = inlined_call_operand.hbm [shape: f32[128,128], index: 5, kind: input, shape index: {}]
  %s6 = inlined_call_operand.hbm [shape: f32[8,128], index: 6, kind: output, shape index: {}]
  %s7 = sld [smem:[#allocation0]]
  $region46: #{tpu_custom_call.1} parent=0
    _
  %s9 = ssub.s32 1, %s7
  %s10 = scalar_select 0, %s9, %s7
  $region1: #{tpu_custom_call.1} parent=0
    #allocation2 [shape = 'u8[8192]{0}', space=vmem, size = 0x2000, scoped, tag = 'input window, operand 0, single buffered']
    #allocation3 [shape = 's32[1]{0}', space=sflag, size = 0x4, scoped, tag = 'scoped memory for tpu_custom_call.1']
    #allocation4 [shape = 's32[1]{0}', space=sflag, size = 0x4, scoped, tag = 'scoped memory for tpu_custom_call.1']
    #allocation5 [shape = 'u8[131072]{0}', space=vmem, size = 0x20000, scoped, tag = 'input window, operand 1, single buffered']
    #allocation6 [shape = 's32[1]{0}', space=sflag, size = 0x4, scoped, tag = 'scoped memory for tpu_custom_call.1']
    #allocation7 [shape = 'u8[65536]{0}', space=vmem, size = 0x10000, scoped, tag = 'input window, operand 5, single buffered']
    #allocation8 [shape = 'u8[4096]{0}', space=vmem, size = 0x1000, scoped, tag = 'output window, operand 0, single buffered']
    %11 = vsyncpa [#allocation3], 0
    %12 = vsyncpa [#allocation6], 0
    %13 = vsyncpa [#allocation4], 0
    // Predicated region
    $region2: #{tpu_custom_call.1} parent=1 // pred_check
      _
    $region3: #{tpu_custom_call.1} parent=1 // pred_check_branch
      %15 = sbr.rel (0) target = $region5
    $region4: #{tpu_custom_call.1} parent=1 // pred_region
      %17 = vsyncadd [#allocation3], 0
      %s19 = sshll.u32 %s0, 4
      %s20 = int_to_ptr.hbm [resolvable:$true] %s19
      %s21 = sshll.u32 [#allocation2], 4
      %s22 = int_to_ptr.vmem [resolvable:$true] %s21
      %24 = dma.hbm_to_vmem [thread:$0]  %s20, 256, %s22, [#allocation3]
    $region5: #{tpu_custom_call.1} parent=1 // pred_fallthru
      _
    // Predicated region
    $region6: #{tpu_custom_call.1} parent=1 // pred_check
      _
    $region7: #{tpu_custom_call.1} parent=1 // pred_check_branch
      %26 = sbr.rel (0) target = $region9
    $region8: #{tpu_custom_call.1} parent=1 // pred_region
      %28 = vsyncadd [#allocation6], 0
      %s29 = sshll.u32 %s1, 4
      %s30 = int_to_ptr.hbm [resolvable:$true] %s29
      %s31 = sshll.u32 [#allocation5], 4
      %s32 = int_to_ptr.vmem [resolvable:$true] %s31
      %37 = dma.hbm_to_vmem [thread:$0]  %s30, 4096, %s32, [#allocation6], 128, 128, 8
    $region9: #{tpu_custom_call.1} parent=1 // pred_fallthru
      _
    // Predicated region
    $region10: #{tpu_custom_call.1} parent=1 // pred_check
      _
    $region11: #{tpu_custom_call.1} parent=1 // pred_check_branch
      %39 = sbr.rel (0) target = $region13
    $region12: #{tpu_custom_call.1} parent=1 // pred_region
      _
    $region13: #{tpu_custom_call.1} parent=1 // pred_fallthru
      _
    // Predicated region
    $region14: #{tpu_custom_call.1} parent=1 // pred_check
      _
    $region15: #{tpu_custom_call.1} parent=1 // pred_check_branch
      %41 = sbr.rel (0) target = $region17
    $region16: #{tpu_custom_call.1} parent=1 // pred_region
      _
    $region17: #{tpu_custom_call.1} parent=1 // pred_fallthru
      _
    // Predicated region
    $region18: #{tpu_custom_call.1} parent=1 // pred_check
      _
    $region19: #{tpu_custom_call.1} parent=1 // pred_check_branch
      %43 = sbr.rel (0) target = $region21
    $region20: #{tpu_custom_call.1} parent=1 // pred_region
      _
    $region21: #{tpu_custom_call.1} parent=1 // pred_fallthru
      _
    // Predicated region
    $region22: #{tpu_custom_call.1} parent=1 // pred_check
      _
    $region23: #{tpu_custom_call.1} parent=1 // pred_check_branch
      %45 = sbr.rel (0) target = $region25
    $region24: #{tpu_custom_call.1} parent=1 // pred_region
      %47 = vsyncadd [#allocation6], 0
      %s48 = sshll.u32 %s5, 4
      %s49 = int_to_ptr.hbm [resolvable:$true] %s48
      %s50 = sshll.u32 [#allocation7], 4
      %s51 = int_to_ptr.vmem [resolvable:$true] %s50
      %56 = dma.hbm_to_vmem [thread:$0]  %s49, 2048, %s51, [#allocation6], 128, 128, 8
    $region25: #{tpu_custom_call.1} parent=1 // pred_fallthru
      _
    // Predicated region
    $region26: #{tpu_custom_call.1} parent=1 // pred_check
      _
    $region27: #{tpu_custom_call.1} parent=1 // pred_check_branch
      %58 = sbr.rel (0) target = $region29
    $region28: #{tpu_custom_call.1} parent=1 // pred_region
      %60 = dma.done [#allocation3], 256
    $region29: #{tpu_custom_call.1} parent=1 // pred_fallthru
      _
    // Predicated region
    $region30: #{tpu_custom_call.1} parent=1 // pred_check
      _
    $region31: #{tpu_custom_call.1} parent=1 // pred_check_branch
      %62 = sbr.rel (0) target = $region33
    $region32: #{tpu_custom_call.1} parent=1 // pred_region
      %64 = dma.done [#allocation6], 4096
    $region33: #{tpu_custom_call.1} parent=1 // pred_fallthru
      _
    // Predicated region
    $region34: #{tpu_custom_call.1} parent=1 // pred_check
      _
    $region35: #{tpu_custom_call.1} parent=1 // pred_check_branch
      %66 = sbr.rel (0) target = $region37
    $region36: #{tpu_custom_call.1} parent=1 // pred_region
      %68 = dma.done [#allocation6], 2048
    $region37: #{tpu_custom_call.1} parent=1 // pred_fallthru
      _
    %v69 = vld [vmem:[#allocation2] sm:$0xff]
    %v70 = vld [vmem:[#allocation2 + $0x8] sm:$0xff]
    %v71 = vld [vmem:[#allocation5] sm:$0xff]
    %v72 = vld [vmem:[#allocation5 + $0x8] sm:$0xff]
    %v73 = vld [vmem:[#allocation5 + $0x10] sm:$0xff]
    %v74 = vld [vmem:[#allocation5 + $0x18] sm:$0xff]
    %v75 = vld [vmem:[#allocation5 + $0x20] sm:$0xff]
    %v76 = vld [vmem:[#allocation5 + $0x28] sm:$0xff]
    %v77 = vld [vmem:[#allocation5 + $0x30] sm:$0xff]
    %v78 = vld [vmem:[#allocation5 + $0x38] sm:$0xff]
    %v79 = vld [vmem:[#allocation5 + $0x40] sm:$0xff]
    %v80 = vld [vmem:[#allocation5 + $0x48] sm:$0xff]
    %v81 = vld [vmem:[#allocation5 + $0x50] sm:$0xff]
    %v82 = vld [vmem:[#allocation5 + $0x58] sm:$0xff]
    %v83 = vld [vmem:[#allocation5 + $0x60] sm:$0xff]
    %v84 = vld [vmem:[#allocation5 + $0x68] sm:$0xff]
    %v85 = vld [vmem:[#allocation5 + $0x70] sm:$0xff]
    %v86 = vld [vmem:[#allocation5 + $0x78] sm:$0xff]
    %v87 = vld [vmem:[#allocation5 + $0x80] sm:$0xff]
    %v88 = vld [vmem:[#allocation5 + $0x88] sm:$0xff]
    %v89 = vld [vmem:[#allocation5 + $0x90] sm:$0xff]
    %v90 = vld [vmem:[#allocation5 + $0x98] sm:$0xff]
    %v91 = vld [vmem:[#allocation5 + $0xa0] sm:$0xff]
    %v92 = vld [vmem:[#allocation5 + $0xa8] sm:$0xff]
    %v93 = vld [vmem:[#allocation5 + $0xb0] sm:$0xff]
    %v94 = vld [vmem:[#allocation5 + $0xb8] sm:$0xff]
    %v95 = vld [vmem:[#allocation5 + $0xc0] sm:$0xff]
    %v96 = vld [vmem:[#allocation5 + $0xc8] sm:$0xff]
    %v97 = vld [vmem:[#allocation5 + $0xd0] sm:$0xff]
    %v98 = vld [vmem:[#allocation5 + $0xd8] sm:$0xff]
    %v99 = vld [vmem:[#allocation5 + $0xe0] sm:$0xff]
    %v100 = vld [vmem:[#allocation5 + $0xe8] sm:$0xff]
    %v101 = vld [vmem:[#allocation5 + $0xf0] sm:$0xff]
    %v102 = vld [vmem:[#allocation5 + $0xf8] sm:$0xff]
    %v103 = vld [vmem:[%s2] sm:$0x1]
    %v105 = vperm.slane %v103, 0
    %107 = vmatpush.msra.mxu0 %v86
    %108 = vmatpush.msra.mxu0 %v85
    %109 = vmatpush.msra.mxu0 %v84
    %110 = vmatpush.msra.mxu0 %v83
    %111 = vmatpush.msra.mxu0 %v82
    %112 = vmatpush.msra.mxu0 %v81
    %113 = vmatpush.msra.mxu0 %v80
    %114 = vmatpush.msra.mxu0 %v79
    %115 = vmatpush.msra.mxu0 %v78
    %116 = vmatpush.msra.mxu0 %v77
    %117 = vmatpush.msra.mxu0 %v76
    %118 = vmatpush.msra.mxu0 %v75
    %119 = vmatpush.msra.mxu0 %v74
    %120 = vmatpush.msra.mxu0 %v73
    %121 = vmatpush.msra.mxu0 %v72
    %122 = vmatpush.msra.mxu0 %v71
    %123 = vmatmul.f32.gmra.mxu0 %v69
    %v124 = vpop.f32.mrf.mxu0
    %v125 = vadd.f32 %v105, %v124
    %126 = vdwg.mxu0
    %127 = vmatpush.msra.mxu0 %v102
    %128 = vmatpush.msra.mxu0 %v101
    %129 = vmatpush.msra.mxu0 %v100
    %130 = vmatpush.msra.mxu0 %v99
    %131 = vmatpush.msra.mxu0 %v98
    %132 = vmatpush.msra.mxu0 %v97
    %133 = vmatpush.msra.mxu0 %v96
    %134 = vmatpush.msra.mxu0 %v95
    %135 = vmatpush.msra.mxu0 %v94
    %136 = vmatpush.msra.mxu0 %v93
    %137 = vmatpush.msra.mxu0 %v92
    %138 = vmatpush.msra.mxu0 %v91
    %139 = vmatpush.msra.mxu0 %v90
    %140 = vmatpush.msra.mxu0 %v89
    %141 = vmatpush.msra.mxu0 %v88
    %142 = vmatpush.msra.mxu0 %v87
    %143 = vmatmul.f32.gmra.mxu0 %v70
    %v144 = vpop.f32.mrf.mxu0
    %v145 = vadd.f32 %v125, %v144
    %146 = vdwg.mxu0
    %v147 = vld [vmem:[#allocation7] sm:$0xff]
    %v148 = vld [vmem:[#allocation7 + $0x8] sm:$0xff]
    %v149 = vld [vmem:[#allocation7 + $0x10] sm:$0xff]
    %v150 = vld [vmem:[#allocation7 + $0x18] sm:$0xff]
    %v151 = vld [vmem:[#allocation7 + $0x20] sm:$0xff]
    %v152 = vld [vmem:[#allocation7 + $0x28] sm:$0xff]
    %v153 = vld [vmem:[#allocation7 + $0x30] sm:$0xff]
    %v154 = vld [vmem:[#allocation7 + $0x38] sm:$0xff]
    %v155 = vld [vmem:[#allocation7 + $0x40] sm:$0xff]
    %v156 = vld [vmem:[#allocation7 + $0x48] sm:$0xff]
    %v157 = vld [vmem:[#allocation7 + $0x50] sm:$0xff]
    %v158 = vld [vmem:[#allocation7 + $0x58] sm:$0xff]
    %v159 = vld [vmem:[#allocation7 + $0x60] sm:$0xff]
    %v160 = vld [vmem:[#allocation7 + $0x68] sm:$0xff]
    %v161 = vld [vmem:[#allocation7 + $0x70] sm:$0xff]
    %v162 = vld [vmem:[#allocation7 + $0x78] sm:$0xff]
    %163 = vmatpush.msra.mxu0 %v162
    %164 = vmatpush.msra.mxu0 %v161
    %165 = vmatpush.msra.mxu0 %v160
    %166 = vmatpush.msra.mxu0 %v159
    %167 = vmatpush.msra.mxu0 %v158
    %168 = vmatpush.msra.mxu0 %v157
    %169 = vmatpush.msra.mxu0 %v156
    %170 = vmatpush.msra.mxu0 %v155
    %171 = vmatpush.msra.mxu0 %v154
    %172 = vmatpush.msra.mxu0 %v153
    %173 = vmatpush.msra.mxu0 %v152
    %174 = vmatpush.msra.mxu0 %v151
    %175 = vmatpush.msra.mxu0 %v150
    %176 = vmatpush.msra.mxu0 %v149
    %177 = vmatpush.msra.mxu0 %v148
    %178 = vmatpush.msra.mxu0 %v147
    %179 = vmatmul.f32.gmra.mxu0 %v145
    %v180 = vpop.f32.mrf.mxu0
    %v181 = vadd.f32 0.0, %v180
    %182 = vdwg.mxu0
    %v183 = vmul.f32 %v181, 0.03125
    %v184 = vsub.f32 %v145, %v183
    %v185 = vmul.f32 %v184, %v184
    %186 = vmatpush.msra.mxu0 %v162
    %187 = vmatpush.msra.mxu0 %v161
    %188 = vmatpush.msra.mxu0 %v160
    %189 = vmatpush.msra.mxu0 %v159
    %190 = vmatpush.msra.mxu0 %v158
    %191 = vmatpush.msra.mxu0 %v157
    %192 = vmatpush.msra.mxu0 %v156
    %193 = vmatpush.msra.mxu0 %v155
    %194 = vmatpush.msra.mxu0 %v154
    %195 = vmatpush.msra.mxu0 %v153
    %196 = vmatpush.msra.mxu0 %v152
    %197 = vmatpush.msra.mxu0 %v151
    %198 = vmatpush.msra.mxu0 %v150
    %199 = vmatpush.msra.mxu0 %v149
    %200 = vmatpush.msra.mxu0 %v148
    %201 = vmatpush.msra.mxu0 %v147
    %202 = vmatmul.f32.gmra.mxu0 %v185
    %v203 = vpop.f32.mrf.mxu0
    %v204 = vadd.f32 0.0, %v203
    %205 = vdwg.mxu0
    %v206 = vmul.f32 %v204, 0.03125
    %v207 = vadd.f32 %v206, 1e-05
    %v208 = vrsqrt.pop %v207
    %v209 = vmul.f32 %v208, %v207
    %v210 = vmul.f32 %v209, %v208
    %v211 = vmul.f32 0.5, %v210
    %v212 = vsub.f32 1.5, %v211
    %v213 = vmul.f32 %v208, %v212
    %vm214 = vweird.f32 %v207
    %vm215 = vweird.f32 %v208
    %vm216 = vmor %vm214, %vm215
    %v217 = vsel %vm216, %v208, %v213
    %v218 = vmul.f32 %v184, %v217
    %v219 = vld [vmem:[%s3] sm:$0x1]
    %v221 = vperm.slane %v219, 0
    %v223 = vmul.f32 %v218, %v221
    %v224 = vld [vmem:[%s4] sm:$0x1]
    %v226 = vperm.slane %v224, 0
    %v228 = vadd.f32 %v223, %v226
    %229 = vst [vmem:[#allocation8] sm:$0xff] %v228
    // Predicated region
    $region38: #{tpu_custom_call.1} parent=1 // pred_check
      _
    $region39: #{tpu_custom_call.1} parent=1 // pred_check_branch
      %231 = sbr.rel (0) target = $region41
    $region40: #{tpu_custom_call.1} parent=1 // pred_region
      %233 = vsyncadd [#allocation4], 0
      %s235 = sshll.u32 [#allocation8], 4
      %s236 = int_to_ptr.vmem [resolvable:$true] %s235
      %s237 = sshll.u32 %s6, 4
      %s238 = int_to_ptr.hbm [resolvable:$true] %s237
      %240 = dma.vmem_to_hbm [thread:$0]  %s236, 128, %s238, [#allocation4]
    $region41: #{tpu_custom_call.1} parent=1 // pred_fallthru
      _
    // Predicated region
    $region42: #{tpu_custom_call.1} parent=1 // pred_check
      _
    $region43: #{tpu_custom_call.1} parent=1 // pred_check_branch
      %242 = sbr.rel (0) target = $region45
    $region44: #{tpu_custom_call.1} parent=1 // pred_region
      %244 = dma.done [#allocation4], 128
    $region45: #{tpu_custom_call.1} parent=1 // pred_fallthru
      _
    %245 = vsyncpa [#allocation3], 1
    %246 = vsyncpa [#allocation6], 1
    %247 = vsyncpa [#allocation4], 1

</llo_original>
